<compile_context>
chip_gen: v7x
topology: tpu7x:2x2x1
jax: 0.10.0
libtpu: 0.0.40
codegen_flags: <defaults>
</compile_context>

<pallas_src>
import jax
import jax.numpy as jnp
from jax.experimental import pallas as pl
from jax.experimental.pallas import tpu as pltpu


# ---------------------------------------------------------------------------
# Pallas kernel: full MLP2 forward on one row-tile
# ---------------------------------------------------------------------------
def _mlp2_kernel(x_ref, w1_ref, b1_ref, w2_ref, b2_ref, w3_ref, b3_ref, o_ref):
    """o = log_softmax(relu(relu(x@W1+b1)@W2+b2)@W3+b3).

    Matmuls use bf16 operands with f32 accumulation.  Padded class columns of
    W3 are zero and their b3 entries are -1e30, so they vanish from the
    softmax normalization (exact match with the unpadded computation).
    """
    x = x_ref[...].astype(jnp.bfloat16)
    h = jnp.dot(x, w1_ref[...], preferred_element_type=jnp.float32)
    h = jnp.maximum(h + b1_ref[...], 0.0)

    h = jnp.dot(h.astype(jnp.bfloat16), w2_ref[...],
                preferred_element_type=jnp.float32)
    h = jnp.maximum(h + b2_ref[...], 0.0)

    logits = jnp.dot(h.astype(jnp.bfloat16), w3_ref[...],
                     preferred_element_type=jnp.float32)
    logits = logits + b3_ref[...]            # padded columns -> ~-1e30

    m = jnp.max(logits, axis=-1, keepdims=True)
    s = logits - m                            # padded cols: exp(-1e30 - m) == 0
    out = s - jnp.log(jnp.sum(jnp.exp(s), axis=-1, keepdims=True))
    o_ref[...] = out.astype(o_ref.dtype)


# ---------------------------------------------------------------------------
# Wrapper: tiling, weight casting, lane-dense class padding
# ---------------------------------------------------------------------------
def _round_up(x, m):
    return ((x + m - 1) // m) * m


def mlp2_forward(params, x):
    """x: (M, input_size) f32 -> log-probs (M, output_size) f32."""
    M, K = x.shape
    w1, b1 = params["fc1_w"], params["fc1_b"]   # (K, 512), (512,)
    w2, b2 = params["fc3_w"], params["fc3_b"]   # (512, 128), (128,)
    w3, b3 = params["fc5_w"], params["fc5_b"]   # (128, N), (N,)
    H1, H2, N = w1.shape[1], w2.shape[1], w3.shape[1]

    # Lane-dense class dimension for the output / W3 / b3 only.
    N_pad = _round_up(N, 128)

    # Row tile: target 512 rows, but keep >= 2 grid steps when the batch is
    # large enough (v7x megacore) and never pad more than one tile of rows.
    TM = max(8, min(512, _round_up(-(-M // 2), 8)))
    M_pad = _round_up(M, TM)

    # Only row padding (no-op when M is already a multiple of TM); K stays
    # unpadded — a block dim equal to the full array dim is legal.
    x_p = x if M_pad == M else jnp.pad(x, ((0, M_pad - M), (0, 0)))

    # One-time weight prep: bf16 cast (MXU-native), pad W3 classes with zero
    # columns, pad b3 with -1e30 so padded logits fall out of the softmax.
    w1_c = w1.astype(jnp.bfloat16)
    w2_c = w2.astype(jnp.bfloat16)
    w3_c = jnp.pad(w3, ((0, 0), (0, N_pad - N))).astype(jnp.bfloat16)
    b3_p = jnp.pad(b3, (0, N_pad - N), constant_values=-1e30)

    grid = (M_pad // TM,)

    out = pl.pallas_call(
        _mlp2_kernel,
        out_shape=jax.ShapeDtypeStruct((M_pad, N_pad), jnp.float32),
        grid=grid,
        in_specs=[
            pl.BlockSpec((TM, K), lambda i: (i, 0)),      # x row-tile (pipelined)
            pl.BlockSpec((K, H1), lambda i: (0, 0)),      # W1 (VMEM-resident)
            pl.BlockSpec((1, H1), lambda i: (0, 0)),      # b1
            pl.BlockSpec((H1, H2), lambda i: (0, 0)),     # W2
            pl.BlockSpec((1, H2), lambda i: (0, 0)),      # b2
            pl.BlockSpec((H2, N_pad), lambda i: (0, 0)),  # W3 (class-padded)
            pl.BlockSpec((1, N_pad), lambda i: (0, 0)),   # b3 (-1e30 padded)
        ],
        out_specs=pl.BlockSpec((TM, N_pad), lambda i: (i, 0)),
        compiler_params=pltpu.CompilerParams(
            dimension_semantics=("parallel",),     # v7x megacore; no-op v5e/v6e
            vmem_limit_bytes=32 * 1024 * 1024,     # lift v5e's 16 MiB default
        ),
    )(
        x_p,
        w1_c, b1.reshape(1, H1),
        w2_c, b2.reshape(1, H2),
        w3_c, b3_p.reshape(1, N_pad),
    )
    # Trim padded rows / classes (cheap: M x N slice). Callers that tolerate a
    # padded class dim can skip this to save the copy.
    return out[:M, :N]


# ---------------------------------------------------------------------------
# Parameters (PyTorch nn.Linear-style uniform init)
# ---------------------------------------------------------------------------
def init_params(key, input_size, output_size):
    def uniform(k, shape, fan_in):
        bound = 1.0 / jnp.sqrt(jnp.asarray(fan_in, jnp.float32))
        return jax.random.uniform(k, shape, jnp.float32, -bound, bound)

    ks = jax.random.split(key, 6)
    return {
        "fc1_w": uniform(ks[0], (input_size, 512), input_size),
        "fc1_b": uniform(ks[1], (512,), input_size),
        "fc3_w": uniform(ks[2], (512, 128), 512),
        "fc3_b": uniform(ks[3], (128,), 512),
        "fc5_w": uniform(ks[4], (128, output_size), 128),
        "fc5_b": uniform(ks[5], (output_size,), 128),
    }


def _reference_f32(params, x):
    h = jnp.maximum(x @ params["fc1_w"] + params["fc1_b"], 0.0)
    h = jnp.maximum(h @ params["fc3_w"] + params["fc3_b"], 0.0)
    logits = h @ params["fc5_w"] + params["fc5_b"]
    return jax.nn.log_softmax(logits, axis=1)


def _reference_bf16(params, x):
    bf = jnp.bfloat16
    h = jnp.dot(x.astype(bf), params["fc1_w"].astype(bf),
                preferred_element_type=jnp.float32)
    h = jnp.maximum(h + params["fc1_b"], 0.0)
    h = jnp.dot(h.astype(bf), params["fc3_w"].astype(bf),
                preferred_element_type=jnp.float32)
    h = jnp.maximum(h + params["fc3_b"], 0.0)
    logits = jnp.dot(h.astype(bf), params["fc5_w"].astype(bf),
                     preferred_element_type=jnp.float32)
    logits = logits + params["fc5_b"]
    return jax.nn.log_softmax(logits, axis=1)


if __name__ == "__main__":
    key = jax.random.PRNGKey(0)
    k_x, k_p = jax.random.split(key)

    batch, input_size, output_size = 2, 64, 10
    x = jax.random.normal(k_x, (batch, input_size), jnp.float32)
    params = init_params(k_p, input_size, output_size)

    out = jax.block_until_ready(jax.jit(mlp2_forward)(params, x))

    assert out.shape == (batch, output_size)
    assert out.dtype == jnp.float32
    # log_softmax rows should sum (in prob space) to ~1.
    assert jnp.allclose(jnp.sum(jnp.exp(out), axis=1), 1.0, atol=1e-4)
    # Match a bf16-operand / f32-accumulation reference tightly ...
    ref_bf16 = _reference_bf16(params, x)
    assert jnp.allclose(out, ref_bf16, atol=5e-3, rtol=5e-3)
    # ... and the full-f32 reference up to bf16 quantization noise.
    ref_f32 = _reference_f32(params, x)
    assert jnp.allclose(out, ref_f32, atol=1e-1, rtol=1e-1)
    print("KERNEL_OK")
</pallas_src>

<mosaic_0001>
module attributes {stable_mosaic.version = 11 : i64} {
  func.func @_mlp2_kernel(%arg0: i32, %arg1: memref<8x64xf32, #tpu.memory_space<vmem>>, %arg2: memref<64x512xbf16, #tpu.memory_space<vmem>>, %arg3: memref<1x512xf32, #tpu.memory_space<vmem>>, %arg4: memref<512x128xbf16, #tpu.memory_space<vmem>>, %arg5: memref<1x128xf32, #tpu.memory_space<vmem>>, %arg6: memref<128x128xbf16, #tpu.memory_space<vmem>>, %arg7: memref<1x128xf32, #tpu.memory_space<vmem>>, %arg8: memref<8x128xf32, #tpu.memory_space<vmem>>) attributes {dimension_semantics = [#tpu.dimension_semantics<parallel>], iteration_bounds = array<i64: 1>, scalar_prefetch = 0 : i64, scratch_operands = 0 : i64, tpu.core_type = #tpu.core_type<tc>, window_params = [{transform_indices = @transform_0, window_bounds = array<i64: 8, 64>}, {pipeline_mode = #tpu.pipeline_mode<synchronous>, transform_indices = @transform_1, window_bounds = array<i64: 64, 512>}, {pipeline_mode = #tpu.pipeline_mode<synchronous>, transform_indices = @transform_2, window_bounds = array<i64: 1, 512>}, {pipeline_mode = #tpu.pipeline_mode<synchronous>, transform_indices = @transform_3, window_bounds = array<i64: 512, 128>}, {pipeline_mode = #tpu.pipeline_mode<synchronous>, transform_indices = @transform_4, window_bounds = array<i64: 1, 128>}, {pipeline_mode = #tpu.pipeline_mode<synchronous>, transform_indices = @transform_5, window_bounds = array<i64: 128, 128>}, {pipeline_mode = #tpu.pipeline_mode<synchronous>, transform_indices = @transform_6, window_bounds = array<i64: 1, 128>}, {transform_indices = @transform_7, window_bounds = array<i64: 8, 128>}]} {
    %c0 = arith.constant 0 : index
    %c0_0 = arith.constant 0 : index
    %0 = vector.load %arg1[%c0, %c0_0] : memref<8x64xf32, #tpu.memory_space<vmem>>, vector<8x64xf32>
    %1 = arith.truncf %0 : vector<8x64xf32> to vector<8x64xbf16>
    %c0_1 = arith.constant 0 : index
    %c0_2 = arith.constant 0 : index
    %2 = vector.load %arg2[%c0_1, %c0_2] : memref<64x512xbf16, #tpu.memory_space<vmem>>, vector<64x512xbf16>
    %cst = arith.constant dense<0.000000e+00> : vector<8x512xf32>
    %3 = tpu.matmul %1, %2, %cst {dimension_numbers = #tpu.dot_dimension_numbers<[1], [0], [0], [1], [0, 0, 1, 1], [], []>} : vector<8x64xbf16>, vector<64x512xbf16>, vector<8x512xf32> -> vector<8x512xf32>
    %c0_3 = arith.constant 0 : index
    %c0_4 = arith.constant 0 : index
    %4 = vector.load %arg3[%c0_3, %c0_4] : memref<1x512xf32, #tpu.memory_space<vmem>>, vector<1x512xf32>
    %5 = vector.broadcast %4 : vector<1x512xf32> to vector<8x512xf32>
    %6 = arith.addf %3, %5 : vector<8x512xf32>
    %cst_5 = arith.constant 0.000000e+00 : f32
    %7 = vector.broadcast %cst_5 : f32 to vector<8x512xf32>
    %8 = arith.maximumf %6, %7 : vector<8x512xf32>
    %9 = arith.truncf %8 : vector<8x512xf32> to vector<8x512xbf16>
    %c0_6 = arith.constant 0 : index
    %c0_7 = arith.constant 0 : index
    %10 = vector.load %arg4[%c0_6, %c0_7] : memref<512x128xbf16, #tpu.memory_space<vmem>>, vector<512x128xbf16>
    %cst_8 = arith.constant dense<0.000000e+00> : vector<8x128xf32>
    %11 = tpu.matmul %9, %10, %cst_8 {dimension_numbers = #tpu.dot_dimension_numbers<[1], [0], [0], [1], [0, 0, 1, 1], [], []>} : vector<8x512xbf16>, vector<512x128xbf16>, vector<8x128xf32> -> vector<8x128xf32>
    %c0_9 = arith.constant 0 : index
    %c0_10 = arith.constant 0 : index
    %12 = vector.load %arg5[%c0_9, %c0_10] : memref<1x128xf32, #tpu.memory_space<vmem>>, vector<1x128xf32>
    %13 = vector.broadcast %12 : vector<1x128xf32> to vector<8x128xf32>
    %14 = arith.addf %11, %13 : vector<8x128xf32>
    %cst_11 = arith.constant 0.000000e+00 : f32
    %15 = vector.broadcast %cst_11 : f32 to vector<8x128xf32>
    %16 = arith.maximumf %14, %15 : vector<8x128xf32>
    %17 = arith.truncf %16 : vector<8x128xf32> to vector<8x128xbf16>
    %c0_12 = arith.constant 0 : index
    %c0_13 = arith.constant 0 : index
    %18 = vector.load %arg6[%c0_12, %c0_13] : memref<128x128xbf16, #tpu.memory_space<vmem>>, vector<128x128xbf16>
    %cst_14 = arith.constant dense<0.000000e+00> : vector<8x128xf32>
    %19 = tpu.matmul %17, %18, %cst_14 {dimension_numbers = #tpu.dot_dimension_numbers<[1], [0], [0], [1], [0, 0, 1, 1], [], []>} : vector<8x128xbf16>, vector<128x128xbf16>, vector<8x128xf32> -> vector<8x128xf32>
    %c0_15 = arith.constant 0 : index
    %c0_16 = arith.constant 0 : index
    %20 = vector.load %arg7[%c0_15, %c0_16] : memref<1x128xf32, #tpu.memory_space<vmem>>, vector<1x128xf32>
    %21 = vector.broadcast %20 : vector<1x128xf32> to vector<8x128xf32>
    %22 = arith.addf %19, %21 : vector<8x128xf32>
    %cst_17 = arith.constant dense<0xFF800000> : vector<8xf32>
    %23 = vector.multi_reduction <maximumf>, %22, %cst_17 [1] : vector<8x128xf32> to vector<8xf32>
    %24 = vector.shape_cast %23 : vector<8xf32> to vector<8x1xf32>
    %25 = vector.broadcast %24 : vector<8x1xf32> to vector<8x128xf32>
    %26 = arith.subf %22, %25 : vector<8x128xf32>
    %27 = math.exp %26 : vector<8x128xf32>
    %cst_18 = arith.constant dense<0.000000e+00> : vector<8xf32>
    %28 = vector.multi_reduction <add>, %27, %cst_18 [1] : vector<8x128xf32> to vector<8xf32>
    %29 = vector.shape_cast %28 : vector<8xf32> to vector<8x1xf32>
    %30 = math.log %29 : vector<8x1xf32>
    %31 = vector.broadcast %30 : vector<8x1xf32> to vector<8x128xf32>
    %32 = arith.subf %26, %31 : vector<8x128xf32>
    %c0_19 = arith.constant 0 : index
    %c0_20 = arith.constant 0 : index
    %33 = vector.load %arg8[%c0_19, %c0_20] : memref<8x128xf32, #tpu.memory_space<vmem>>, vector<8x128xf32>
    tpu.vector_store %arg8[%c0_19, %c0_20], %32 {strides = array<i32>} : memref<8x128xf32, #tpu.memory_space<vmem>>, vector<8x128xf32>,
    return
  }
  func.func @transform_0(%arg0: i32) -> (i32, i32) {
    %c0_i32 = arith.constant 0 : i32
    %c0_i32_0 = arith.constant 0 : i32
    return %arg0, %c0_i32 : i32, i32
  }
  func.func @transform_1(%arg0: i32) -> (i32, i32) {
    %c0_i32 = arith.constant 0 : i32
    %c0_i32_0 = arith.constant 0 : i32
    %c0_i32_1 = arith.constant 0 : i32
    return %c0_i32, %c0_i32_0 : i32, i32
  }
  func.func @transform_2(%arg0: i32) -> (i32, i32) {
    %c0_i32 = arith.constant 0 : i32
    %c0_i32_0 = arith.constant 0 : i32
    %c0_i32_1 = arith.constant 0 : i32
    return %c0_i32, %c0_i32_0 : i32, i32
  }
  func.func @transform_3(%arg0: i32) -> (i32, i32) {
    %c0_i32 = arith.constant 0 : i32
    %c0_i32_0 = arith.constant 0 : i32
    %c0_i32_1 = arith.constant 0 : i32
    return %c0_i32, %c0_i32_0 : i32, i32
  }
  func.func @transform_4(%arg0: i32) -> (i32, i32) {
    %c0_i32 = arith.constant 0 : i32
    %c0_i32_0 = arith.constant 0 : i32
    %c0_i32_1 = arith.constant 0 : i32
    return %c0_i32, %c0_i32_0 : i32, i32
  }
  func.func @transform_5(%arg0: i32) -> (i32, i32) {
    %c0_i32 = arith.constant 0 : i32
    %c0_i32_0 = arith.constant 0 : i32
    %c0_i32_1 = arith.constant 0 : i32
    return %c0_i32, %c0_i32_0 : i32, i32
  }
  func.func @transform_6(%arg0: i32) -> (i32, i32) {
    %c0_i32 = arith.constant 0 : i32
    %c0_i32_0 = arith.constant 0 : i32
    %c0_i32_1 = arith.constant 0 : i32
    return %c0_i32, %c0_i32_0 : i32, i32
  }
  func.func @transform_7(%arg0: i32) -> (i32, i32) {
    %c0_i32 = arith.constant 0 : i32
    %c0_i32_0 = arith.constant 0 : i32
    return %arg0, %c0_i32 : i32, i32
  }
}

</mosaic_0001>

<llo_original>
// kernel: mlp2_forward.1
$region0: #{mlp2_forward.1}
  #allocation0 [shape = 'u32[]', space=smem, size = 0x4, offset = 0x4, fixed_abs, tag = 'smem constant byte address 0x4 - core index']
  #allocation1 [shape = 'u32[144,128]{1,0:T(1,128)}', space=vmem, size = 0x12000, scoped, tag = 'internal scratch']
  %s0 = inlined_call_operand.vmem [shape: f32[8,64], index: 0, kind: input, shape index: {}]
  %s1 = inlined_call_operand.vmem [shape: bf16[64,512], index: 1, kind: input, shape index: {}]
  %s2 = inlined_call_operand.vmem [shape: f32[1,512], index: 2, kind: input, shape index: {}]
  %s3 = inlined_call_operand.vmem [shape: bf16[512,128], index: 3, kind: input, shape index: {}]
  %s4 = inlined_call_operand.vmem [shape: f32[1,128], index: 4, kind: input, shape index: {}]
  %s5 = inlined_call_operand.vmem [shape: bf16[128,128], index: 5, kind: input, shape index: {}]
  %s6 = inlined_call_operand.vmem [shape: f32[1,128], index: 6, kind: input, shape index: {}]
  %s7 = inlined_call_operand.vmem [shape: f32[8,128], index: 7, kind: output, shape index: {}]
  %s8 = sld [smem:[#allocation0]]
  $region38: #{mlp2_forward.1} parent=0
    _
  %s10 = ssub.s32 1, %s8
  %s11 = scalar_select 0, %s10, %s8
  // Predicated region
  $region2: #{mlp2_forward.1} parent=0 // pred_check
    _
  $region3: #{mlp2_forward.1} parent=0 // pred_check_branch
    %13 = sbr.rel (0) target = $region5
  $region4: #{mlp2_forward.1} parent=0 // pred_region
    _
  $region5: #{mlp2_forward.1} parent=0 // pred_fallthru
    _
  // Predicated region
  $region6: #{mlp2_forward.1} parent=0 // pred_check
    _
  $region7: #{mlp2_forward.1} parent=0 // pred_check_branch
    %15 = sbr.rel (0) target = $region9
  $region8: #{mlp2_forward.1} parent=0 // pred_region
    _
  $region9: #{mlp2_forward.1} parent=0 // pred_fallthru
    _
  // Predicated region
  $region10: #{mlp2_forward.1} parent=0 // pred_check
    _
  $region11: #{mlp2_forward.1} parent=0 // pred_check_branch
    %17 = sbr.rel (0) target = $region13
  $region12: #{mlp2_forward.1} parent=0 // pred_region
    _
  $region13: #{mlp2_forward.1} parent=0 // pred_fallthru
    _
  // Predicated region
  $region14: #{mlp2_forward.1} parent=0 // pred_check
    _
  $region15: #{mlp2_forward.1} parent=0 // pred_check_branch
    %19 = sbr.rel (0) target = $region17
  $region16: #{mlp2_forward.1} parent=0 // pred_region
    _
  $region17: #{mlp2_forward.1} parent=0 // pred_fallthru
    _
  // Predicated region
  $region18: #{mlp2_forward.1} parent=0 // pred_check
    _
  $region19: #{mlp2_forward.1} parent=0 // pred_check_branch
    %21 = sbr.rel (0) target = $region21
  $region20: #{mlp2_forward.1} parent=0 // pred_region
    _
  $region21: #{mlp2_forward.1} parent=0 // pred_fallthru
    _
  // Predicated region
  $region22: #{mlp2_forward.1} parent=0 // pred_check
    _
  $region23: #{mlp2_forward.1} parent=0 // pred_check_branch
    %23 = sbr.rel (0) target = $region25
  $region24: #{mlp2_forward.1} parent=0 // pred_region
    _
  $region25: #{mlp2_forward.1} parent=0 // pred_fallthru
    _
  // Predicated region
  $region26: #{mlp2_forward.1} parent=0 // pred_check
    _
  $region27: #{mlp2_forward.1} parent=0 // pred_check_branch
    %25 = sbr.rel (0) target = $region29
  $region28: #{mlp2_forward.1} parent=0 // pred_region
    _
  $region29: #{mlp2_forward.1} parent=0 // pred_fallthru
    _
  %v27 = vld [vmem:[%s0] sm:$0xff]
  %v28 = vpack.c.bf16 %v27, %v27
  %v29 = vld [vmem:[%s1] sm:$0xff]
  %v30 = vld [vmem:[%s1 + $0x8] sm:$0xff]
  %v31 = vld [vmem:[%s1 + $0x10] sm:$0xff]
  %v32 = vld [vmem:[%s1 + $0x18] sm:$0xff]
  %v33 = vld [vmem:[%s1 + $0x20] sm:$0xff]
  %v34 = vld [vmem:[%s1 + $0x28] sm:$0xff]
  %v35 = vld [vmem:[%s1 + $0x30] sm:$0xff]
  %v36 = vld [vmem:[%s1 + $0x38] sm:$0xff]
  %v37 = vld [vmem:[%s1 + $0x40] sm:$0xff]
  %v38 = vld [vmem:[%s1 + $0x48] sm:$0xff]
  %v39 = vld [vmem:[%s1 + $0x50] sm:$0xff]
  %v40 = vld [vmem:[%s1 + $0x58] sm:$0xff]
  %v41 = vld [vmem:[%s1 + $0x60] sm:$0xff]
  %v42 = vld [vmem:[%s1 + $0x68] sm:$0xff]
  %v43 = vld [vmem:[%s1 + $0x70] sm:$0xff]
  %v44 = vld [vmem:[%s1 + $0x78] sm:$0xff]
  %v45 = vld [vmem:[%s2] sm:$0xf]
  %v47 = vlaneseq
  %v48 = vshrl.u32 %v47, 7
  %v49 = vsub.s32 0, %v48
  %v50 = vrot.slane %v45, %v49
  %v51 = vlaneseq
  %v52 = vshrl.u32 %v51, 7
  %v53 = vsub.s32 1, %v52
  %v54 = vrot.slane %v45, %v53
  %v55 = vlaneseq
  %v56 = vshrl.u32 %v55, 7
  %v57 = vsub.s32 2, %v56
  %v58 = vrot.slane %v45, %v57
  %v59 = vlaneseq
  %v60 = vshrl.u32 %v59, 7
  %v61 = vsub.s32 3, %v60
  %v62 = vrot.slane %v45, %v61
  %v83 = vunpack.c.l.b16 %v29
  %v84 = vunpack.c.h.b16 %v29
  %v85 = vunpack.c.l.b16 %v30
  %v86 = vunpack.c.h.b16 %v30
  %v87 = vunpack.c.l.b16 %v31
  %v88 = vunpack.c.h.b16 %v31
  %v89 = vunpack.c.l.b16 %v32
  %v90 = vunpack.c.h.b16 %v32
  %v91 = vunpack.c.l.b16 %v33
  %v92 = vunpack.c.h.b16 %v33
  %v93 = vunpack.c.l.b16 %v34
  %v94 = vunpack.c.h.b16 %v34
  %v95 = vunpack.c.l.b16 %v35
  %v96 = vunpack.c.h.b16 %v35
  %v97 = vunpack.c.l.b16 %v36
  %v98 = vunpack.c.h.b16 %v36
  %v99 = vunpack.c.l.b16 %v37
  %v100 = vunpack.c.h.b16 %v37
  %v101 = vunpack.c.l.b16 %v38
  %v102 = vunpack.c.h.b16 %v38
  %v103 = vunpack.c.l.b16 %v39
  %v104 = vunpack.c.h.b16 %v39
  %v105 = vunpack.c.l.b16 %v40
  %v106 = vunpack.c.h.b16 %v40
  %v107 = vunpack.c.l.b16 %v41
  %v108 = vunpack.c.h.b16 %v41
  %v109 = vunpack.c.l.b16 %v42
  %v110 = vunpack.c.h.b16 %v42
  %v111 = vunpack.c.l.b16 %v43
  %v112 = vunpack.c.h.b16 %v43
  %v113 = vunpack.c.l.b16 %v44
  %v114 = vunpack.c.h.b16 %v44
  %v115 = vpack.c.b16 %v87, %v83
  %v116 = vpack.c.b16 %v88, %v84
  %v117 = vpack.c.b16 %v89, %v85
  %v118 = vpack.c.b16 %v90, %v86
  %v119 = vpack.c.b16 %v95, %v91
  %v120 = vpack.c.b16 %v96, %v92
  %v121 = vpack.c.b16 %v97, %v93
  %v122 = vpack.c.b16 %v98, %v94
  %v123 = vpack.c.b16 %v103, %v99
  %v124 = vpack.c.b16 %v104, %v100
  %v125 = vpack.c.b16 %v105, %v101
  %v126 = vpack.c.b16 %v106, %v102
  %v127 = vpack.c.b16 %v111, %v107
  %v128 = vpack.c.b16 %v112, %v108
  %v129 = vpack.c.b16 %v113, %v109
  %v130 = vpack.c.b16 %v114, %v110
  %vm147 = vcmask 523264
  %v149 = vsel %vm147, %v28, 0
  %151 = vmatprep.subr.bf16.mxu0 %v116
  %152 = vmatpush1.bf16.msra.mxu0 %v115
  %153 = vmatprep.subr.bf16.mxu0 %v120
  %154 = vmatpush1.bf16.msra.mxu0 %v119
  %155 = vmatprep.subr.bf16.mxu0 %v124
  %156 = vmatpush1.bf16.msra.mxu0 %v123
  %157 = vmatprep.subr.bf16.mxu0 %v128
  %158 = vmatpush1.bf16.msra.mxu0 %v127
  %159 = vmatprep.subr.bf16.mxu0 0
  %160 = vmatpush1.bf16.msra.mxu0 0
  %161 = vmatprep.subr.bf16.mxu0 0
  %162 = vmatpush1.bf16.msra.mxu0 0
  %163 = vmatprep.subr.bf16.mxu0 0
  %164 = vmatpush1.bf16.msra.mxu0 0
  %165 = vmatprep.subr.bf16.mxu0 0
  %166 = vmatpush1.bf16.msra.mxu0 0
  %167 = vmatprep.subr.bf16.mxu0 0
  %168 = vmatpush1.bf16.msra.mxu0 0
  %169 = vmatprep.subr.bf16.mxu0 0
  %170 = vmatpush1.bf16.msra.mxu0 0
  %171 = vmatprep.subr.bf16.mxu0 0
  %172 = vmatpush1.bf16.msra.mxu0 0
  %173 = vmatprep.subr.bf16.mxu0 0
  %174 = vmatpush1.bf16.msra.mxu0 0
  %175 = vmatprep.subr.bf16.mxu0 0
  %176 = vmatpush1.bf16.msra.mxu0 0
  %177 = vmatprep.subr.bf16.mxu0 0
  %178 = vmatpush1.bf16.msra.mxu0 0
  %179 = vmatprep.subr.bf16.mxu0 0
  %180 = vmatpush1.bf16.msra.mxu0 0
  %181 = vmatprep.subr.bf16.mxu0 0
  %182 = vmatpush1.bf16.msra.mxu0 0
  %183 = vmatprep.mubr.bf16.mxu0 0
  %184 = vmatmul.mubr.bf16.gmra.mrb[0].mxu0 %v149
  %v185 = vpop.f32.mrb[0].mxu0
  %v186 = vadd.f32 %v50, %v185
  %v187 = vpop.f32.mrb[0].mxu0
  %v188 = vadd.f32 %v54, %v187
  %v189 = vpop.f32.mrb[0].mxu0
  %v190 = vpop.f32.mrb[0].mxu0
  %191 = vdwg.mxu0
  %192 = vmatprep.subr.bf16.mxu0 %v118
  %193 = vmatpush1.bf16.msra.mxu0 %v117
  %194 = vmatprep.subr.bf16.mxu0 %v122
  %195 = vmatpush1.bf16.msra.mxu0 %v121
  %196 = vmatprep.subr.bf16.mxu0 %v126
  %197 = vmatpush1.bf16.msra.mxu0 %v125
  %198 = vmatprep.subr.bf16.mxu0 %v130
  %199 = vmatpush1.bf16.msra.mxu0 %v129
  %200 = vmatprep.subr.bf16.mxu0 0
  %201 = vmatpush1.bf16.msra.mxu0 0
  %202 = vmatprep.subr.bf16.mxu0 0
  %203 = vmatpush1.bf16.msra.mxu0 0
  %204 = vmatprep.subr.bf16.mxu0 0
  %205 = vmatpush1.bf16.msra.mxu0 0
  %206 = vmatprep.subr.bf16.mxu0 0
  %207 = vmatpush1.bf16.msra.mxu0 0
  %208 = vmatprep.subr.bf16.mxu0 0
  %209 = vmatpush1.bf16.msra.mxu0 0
  %210 = vmatprep.subr.bf16.mxu0 0
  %211 = vmatpush1.bf16.msra.mxu0 0
  %212 = vmatprep.subr.bf16.mxu0 0
  %213 = vmatpush1.bf16.msra.mxu0 0
  %214 = vmatprep.subr.bf16.mxu0 0
  %215 = vmatpush1.bf16.msra.mxu0 0
  %216 = vmatprep.subr.bf16.mxu0 0
  %217 = vmatpush1.bf16.msra.mxu0 0
  %218 = vmatprep.subr.bf16.mxu0 0
  %219 = vmatpush1.bf16.msra.mxu0 0
  %220 = vmatprep.subr.bf16.mxu0 0
  %221 = vmatpush1.bf16.msra.mxu0 0
  %222 = vmatprep.subr.bf16.mxu0 0
  %223 = vmatpush1.bf16.msra.mxu0 0
  %224 = vmatprep.mubr.bf16.mxu0 0
  %225 = vmatmul.mubr.bf16.gmra.mrb[0].mxu0 %v149
  %v226 = vpop.f32.mrb[0].mxu0
  %v227 = vadd.f32 %v58, %v226
  %v228 = vpop.f32.mrb[0].mxu0
  %v229 = vadd.f32 %v62, %v228
  %v230 = vpop.f32.mrb[0].mxu0
  %v231 = vpop.f32.mrb[0].mxu0
  %232 = vdwg.mxu0
  %v233 = vmax.f32 %v186, 0.0
  %v234 = vmax.f32 %v188, 0.0
  %v235 = vmax.f32 %v227, 0.0
  %v236 = vmax.f32 %v229, 0.0
  %v237 = vpack.c.bf16 %v233, %v233
  %v238 = vpack.c.bf16 %v234, %v234
  %v239 = vpack.c.bf16 %v235, %v235
  %v240 = vpack.c.bf16 %v236, %v236
  %v241 = vld [vmem:[%s3] sm:$0xf]
  %v242 = vld [vmem:[%s3 + $0x4] sm:$0xf]
  %v243 = vld [vmem:[%s3 + $0x8] sm:$0xf]
  %v244 = vld [vmem:[%s3 + $0xc] sm:$0xf]
  %v245 = vld [vmem:[%s3 + $0x10] sm:$0xf]
  %v246 = vld [vmem:[%s3 + $0x14] sm:$0xf]
  %v247 = vld [vmem:[%s3 + $0x18] sm:$0xf]
  %v248 = vld [vmem:[%s3 + $0x1c] sm:$0xf]
  %v249 = vld [vmem:[%s3 + $0x20] sm:$0xf]
  %v250 = vld [vmem:[%s3 + $0x24] sm:$0xf]
  %v251 = vld [vmem:[%s3 + $0x28] sm:$0xf]
  %v252 = vld [vmem:[%s3 + $0x2c] sm:$0xf]
  %v253 = vld [vmem:[%s3 + $0x30] sm:$0xf]
  %v254 = vld [vmem:[%s3 + $0x34] sm:$0xf]
  %v255 = vld [vmem:[%s3 + $0x38] sm:$0xf]
  %v256 = vld [vmem:[%s3 + $0x3c] sm:$0xf]
  %v257 = vld [vmem:[%s3 + $0x40] sm:$0xf]
  %v258 = vld [vmem:[%s3 + $0x44] sm:$0xf]
  %v259 = vld [vmem:[%s3 + $0x48] sm:$0xf]
  %v260 = vld [vmem:[%s3 + $0x4c] sm:$0xf]
  %v261 = vld [vmem:[%s3 + $0x50] sm:$0xf]
  %v262 = vld [vmem:[%s3 + $0x54] sm:$0xf]
  %v263 = vld [vmem:[%s3 + $0x58] sm:$0xf]
  %v264 = vld [vmem:[%s3 + $0x5c] sm:$0xf]
  %v265 = vld [vmem:[%s3 + $0x60] sm:$0xf]
  %v266 = vld [vmem:[%s3 + $0x64] sm:$0xf]
  %v267 = vld [vmem:[%s3 + $0x68] sm:$0xf]
  %v268 = vld [vmem:[%s3 + $0x6c] sm:$0xf]
  %v269 = vld [vmem:[%s3 + $0x70] sm:$0xf]
  %v270 = vld [vmem:[%s3 + $0x74] sm:$0xf]
  %v271 = vld [vmem:[%s3 + $0x78] sm:$0xf]
  %v272 = vld [vmem:[%s3 + $0x7c] sm:$0xf]
  %v273 = vld [vmem:[%s3 + $0x80] sm:$0xf]
  %v274 = vld [vmem:[%s3 + $0x84] sm:$0xf]
  %v275 = vld [vmem:[%s3 + $0x88] sm:$0xf]
  %v276 = vld [vmem:[%s3 + $0x8c] sm:$0xf]
  %v277 = vld [vmem:[%s3 + $0x90] sm:$0xf]
  %v278 = vld [vmem:[%s3 + $0x94] sm:$0xf]
  %v279 = vld [vmem:[%s3 + $0x98] sm:$0xf]
  %v280 = vld [vmem:[%s3 + $0x9c] sm:$0xf]
  %v281 = vld [vmem:[%s3 + $0xa0] sm:$0xf]
  %v282 = vld [vmem:[%s3 + $0xa4] sm:$0xf]
  %v283 = vld [vmem:[%s3 + $0xa8] sm:$0xf]
  %v284 = vld [vmem:[%s3 + $0xac] sm:$0xf]
  %v285 = vld [vmem:[%s3 + $0xb0] sm:$0xf]
  %v286 = vld [vmem:[%s3 + $0xb4] sm:$0xf]
  %v287 = vld [vmem:[%s3 + $0xb8] sm:$0xf]
  %v288 = vld [vmem:[%s3 + $0xbc] sm:$0xf]
  %v289 = vld [vmem:[%s3 + $0xc0] sm:$0xf]
  %v290 = vld [vmem:[%s3 + $0xc4] sm:$0xf]
  %v291 = vld [vmem:[%s3 + $0xc8] sm:$0xf]
  %v292 = vld [vmem:[%s3 + $0xcc] sm:$0xf]
  %v293 = vld [vmem:[%s3 + $0xd0] sm:$0xf]
  %v294 = vld [vmem:[%s3 + $0xd4] sm:$0xf]
  %v295 = vld [vmem:[%s3 + $0xd8] sm:$0xf]
  %v296 = vld [vmem:[%s3 + $0xdc] sm:$0xf]
  %v297 = vld [vmem:[%s3 + $0xe0] sm:$0xf]
  %v298 = vld [vmem:[%s3 + $0xe4] sm:$0xf]
  %v299 = vld [vmem:[%s3 + $0xe8] sm:$0xf]
  %v300 = vld [vmem:[%s3 + $0xec] sm:$0xf]
  %v301 = vld [vmem:[%s3 + $0xf0] sm:$0xf]
  %v302 = vld [vmem:[%s3 + $0xf4] sm:$0xf]
  %v303 = vld [vmem:[%s3 + $0xf8] sm:$0xf]
  %v304 = vld [vmem:[%s3 + $0xfc] sm:$0xf]
  %v305 = vld [vmem:[%s4] sm:$0x1]
  %v307 = vlaneseq
  %v308 = vshrl.u32 %v307, 7
  %v309 = vsub.s32 0, %v308
  %v310 = vrot.slane %v305, %v309
  %v376 = vunpack.c.l.b16 %v241
  %v377 = vunpack.c.l.b16 %v242
  %v378 = vunpack.c.l.b16 %v243
  %v379 = vunpack.c.l.b16 %v244
  %v380 = vunpack.c.l.b16 %v245
  %v381 = vunpack.c.l.b16 %v246
  %v382 = vunpack.c.l.b16 %v247
  %v383 = vunpack.c.l.b16 %v248
  %v384 = vunpack.c.l.b16 %v249
  %v385 = vunpack.c.l.b16 %v250
  %v386 = vunpack.c.l.b16 %v251
  %v387 = vunpack.c.l.b16 %v252
  %v388 = vunpack.c.l.b16 %v253
  %v389 = vunpack.c.l.b16 %v254
  %v390 = vunpack.c.l.b16 %v255
  %v391 = vunpack.c.l.b16 %v256
  %v392 = vunpack.c.l.b16 %v257
  %v393 = vunpack.c.l.b16 %v258
  %v394 = vunpack.c.l.b16 %v259
  %v395 = vunpack.c.l.b16 %v260
  %v396 = vunpack.c.l.b16 %v261
  %v397 = vunpack.c.l.b16 %v262
  %v398 = vunpack.c.l.b16 %v263
  %v399 = vunpack.c.l.b16 %v264
  %v400 = vunpack.c.l.b16 %v265
  %v401 = vunpack.c.l.b16 %v266
  %v402 = vunpack.c.l.b16 %v267
  %v403 = vunpack.c.l.b16 %v268
  %v404 = vunpack.c.l.b16 %v269
  %v405 = vunpack.c.l.b16 %v270
  %v406 = vunpack.c.l.b16 %v271
  %v407 = vunpack.c.l.b16 %v272
  %v408 = vunpack.c.l.b16 %v273
  %v409 = vunpack.c.l.b16 %v274
  %v410 = vunpack.c.l.b16 %v275
  %v411 = vunpack.c.l.b16 %v276
  %v412 = vunpack.c.l.b16 %v277
  %v413 = vunpack.c.l.b16 %v278
  %v414 = vunpack.c.l.b16 %v279
  %v415 = vunpack.c.l.b16 %v280
  %v416 = vunpack.c.l.b16 %v281
  %v417 = vunpack.c.l.b16 %v282
  %v418 = vunpack.c.l.b16 %v283
  %v419 = vunpack.c.l.b16 %v284
  %v420 = vunpack.c.l.b16 %v285
  %v421 = vunpack.c.l.b16 %v286
  %v422 = vunpack.c.l.b16 %v287
  %v423 = vunpack.c.l.b16 %v288
  %v424 = vunpack.c.l.b16 %v289
  %v425 = vunpack.c.l.b16 %v290
  %v426 = vunpack.c.l.b16 %v291
  %v427 = vunpack.c.l.b16 %v292
  %v428 = vunpack.c.l.b16 %v293
  %v429 = vunpack.c.l.b16 %v294
  %v430 = vunpack.c.l.b16 %v295
  %v431 = vunpack.c.l.b16 %v296
  %v432 = vunpack.c.l.b16 %v297
  %v433 = vunpack.c.l.b16 %v298
  %v434 = vunpack.c.l.b16 %v299
  %v435 = vunpack.c.l.b16 %v300
  %v436 = vunpack.c.l.b16 %v301
  %v437 = vunpack.c.l.b16 %v302
  %v438 = vunpack.c.l.b16 %v303
  %v439 = vunpack.c.l.b16 %v304
  %v440 = vpack.c.b16 %v377, %v376
  %v441 = vpack.c.b16 %v379, %v378
  %v442 = vpack.c.b16 %v381, %v380
  %v443 = vpack.c.b16 %v383, %v382
  %v444 = vpack.c.b16 %v385, %v384
  %v445 = vpack.c.b16 %v387, %v386
  %v446 = vpack.c.b16 %v389, %v388
  %v447 = vpack.c.b16 %v391, %v390
  %v448 = vpack.c.b16 %v393, %v392
  %v449 = vpack.c.b16 %v395, %v394
  %v450 = vpack.c.b16 %v397, %v396
  %v451 = vpack.c.b16 %v399, %v398
  %v452 = vpack.c.b16 %v401, %v400
  %v453 = vpack.c.b16 %v403, %v402
  %v454 = vpack.c.b16 %v405, %v404
  %v455 = vpack.c.b16 %v407, %v406
  %v456 = vpack.c.b16 %v409, %v408
  %v457 = vpack.c.b16 %v411, %v410
  %v458 = vpack.c.b16 %v413, %v412
  %v459 = vpack.c.b16 %v415, %v414
  %v460 = vpack.c.b16 %v417, %v416
  %v461 = vpack.c.b16 %v419, %v418
  %v462 = vpack.c.b16 %v421, %v420
  %v463 = vpack.c.b16 %v423, %v422
  %v464 = vpack.c.b16 %v425, %v424
  %v465 = vpack.c.b16 %v427, %v426
  %v466 = vpack.c.b16 %v429, %v428
  %v467 = vpack.c.b16 %v431, %v430
  %v468 = vpack.c.b16 %v433, %v432
  %v469 = vpack.c.b16 %v435, %v434
  %v470 = vpack.c.b16 %v437, %v436
  %v471 = vpack.c.b16 %v439, %v438
  %504 = vmatprep.subr.bf16.mxu0 0
  %505 = vmatpush1.bf16.msra.mxu0 %v440
  %506 = vmatprep.subr.bf16.mxu0 0
  %507 = vmatpush1.bf16.msra.mxu0 %v441
  %508 = vmatprep.subr.bf16.mxu0 0
  %509 = vmatpush1.bf16.msra.mxu0 %v442
  %510 = vmatprep.subr.bf16.mxu0 0
  %511 = vmatpush1.bf16.msra.mxu0 %v443
  %512 = vmatprep.subr.bf16.mxu0 0
  %513 = vmatpush1.bf16.msra.mxu0 %v444
  %514 = vmatprep.subr.bf16.mxu0 0
  %515 = vmatpush1.bf16.msra.mxu0 %v445
  %516 = vmatprep.subr.bf16.mxu0 0
  %517 = vmatpush1.bf16.msra.mxu0 %v446
  %518 = vmatprep.subr.bf16.mxu0 0
  %519 = vmatpush1.bf16.msra.mxu0 %v447
  %520 = vmatprep.subr.bf16.mxu0 0
  %521 = vmatpush1.bf16.msra.mxu0 %v448
  %522 = vmatprep.subr.bf16.mxu0 0
  %523 = vmatpush1.bf16.msra.mxu0 %v449
  %524 = vmatprep.subr.bf16.mxu0 0
  %525 = vmatpush1.bf16.msra.mxu0 %v450
  %526 = vmatprep.subr.bf16.mxu0 0
  %527 = vmatpush1.bf16.msra.mxu0 %v451
  %528 = vmatprep.subr.bf16.mxu0 0
  %529 = vmatpush1.bf16.msra.mxu0 %v452
  %530 = vmatprep.subr.bf16.mxu0 0
  %531 = vmatpush1.bf16.msra.mxu0 %v453
  %532 = vmatprep.subr.bf16.mxu0 0
  %533 = vmatpush1.bf16.msra.mxu0 %v454
  %534 = vmatprep.subr.bf16.mxu0 0
  %535 = vmatpush1.bf16.msra.mxu0 %v455
  %536 = vmatprep.mubr.bf16.mxu0 %v238
  %537 = vmatmul.mubr.bf16.gmra.mrb[0].mxu0 %v237
  %v538 = vpop.f32.mrb[0].mxu0
  %v539 = vadd.f32 %v310, %v538
  %v540 = vpop.f32.mrb[0].mxu0
  %v541 = vpop.f32.mrb[0].mxu0
  %v542 = vpop.f32.mrb[0].mxu0
  %543 = vdwg.mxu0
  %544 = vmatprep.subr.bf16.mxu0 0
  %545 = vmatpush1.bf16.msra.mxu0 %v456
  %546 = vmatprep.subr.bf16.mxu0 0
  %547 = vmatpush1.bf16.msra.mxu0 %v457
  %548 = vmatprep.subr.bf16.mxu0 0
  %549 = vmatpush1.bf16.msra.mxu0 %v458
  %550 = vmatprep.subr.bf16.mxu0 0
  %551 = vmatpush1.bf16.msra.mxu0 %v459
  %552 = vmatprep.subr.bf16.mxu0 0
  %553 = vmatpush1.bf16.msra.mxu0 %v460
  %554 = vmatprep.subr.bf16.mxu0 0
  %555 = vmatpush1.bf16.msra.mxu0 %v461
  %556 = vmatprep.subr.bf16.mxu0 0
  %557 = vmatpush1.bf16.msra.mxu0 %v462
  %558 = vmatprep.subr.bf16.mxu0 0
  %559 = vmatpush1.bf16.msra.mxu0 %v463
  %560 = vmatprep.subr.bf16.mxu0 0
  %561 = vmatpush1.bf16.msra.mxu0 %v464
  %562 = vmatprep.subr.bf16.mxu0 0
  %563 = vmatpush1.bf16.msra.mxu0 %v465
  %564 = vmatprep.subr.bf16.mxu0 0
  %565 = vmatpush1.bf16.msra.mxu0 %v466
  %566 = vmatprep.subr.bf16.mxu0 0
  %567 = vmatpush1.bf16.msra.mxu0 %v467
  %568 = vmatprep.subr.bf16.mxu0 0
  %569 = vmatpush1.bf16.msra.mxu0 %v468
  %570 = vmatprep.subr.bf16.mxu0 0
  %571 = vmatpush1.bf16.msra.mxu0 %v469
  %572 = vmatprep.subr.bf16.mxu0 0
  %573 = vmatpush1.bf16.msra.mxu0 %v470
  %574 = vmatprep.subr.bf16.mxu0 0
  %575 = vmatpush1.bf16.msra.mxu0 %v471
  %576 = vmatprep.mubr.bf16.mxu0 %v240
  %577 = vmatmul.mubr.bf16.gmra.mrb[0].mxu0 %v239
  %v578 = vpop.f32.mrb[0].mxu0
  %v579 = vadd.f32 %v539, %v578
  %v580 = vpop.f32.mrb[0].mxu0
  %v581 = vpop.f32.mrb[0].mxu0
  %v582 = vpop.f32.mrb[0].mxu0
  %583 = vdwg.mxu0
  %v584 = vmax.f32 %v579, 0.0
  %v585 = vpack.c.bf16 %v584, %v584
  %v586 = vld [vmem:[%s5] sm:$0xf]
  %v587 = vld [vmem:[%s5 + $0x4] sm:$0xf]
  %v588 = vld [vmem:[%s5 + $0x8] sm:$0xf]
  %v589 = vld [vmem:[%s5 + $0xc] sm:$0xf]
  %v590 = vld [vmem:[%s5 + $0x10] sm:$0xf]
  %v591 = vld [vmem:[%s5 + $0x14] sm:$0xf]
  %v592 = vld [vmem:[%s5 + $0x18] sm:$0xf]
  %v593 = vld [vmem:[%s5 + $0x1c] sm:$0xf]
  %v594 = vld [vmem:[%s5 + $0x20] sm:$0xf]
  %v595 = vld [vmem:[%s5 + $0x24] sm:$0xf]
  %v596 = vld [vmem:[%s5 + $0x28] sm:$0xf]
  %v597 = vld [vmem:[%s5 + $0x2c] sm:$0xf]
  %v598 = vld [vmem:[%s5 + $0x30] sm:$0xf]
  %v599 = vld [vmem:[%s5 + $0x34] sm:$0xf]
  %v600 = vld [vmem:[%s5 + $0x38] sm:$0xf]
  %v601 = vld [vmem:[%s5 + $0x3c] sm:$0xf]
  %v602 = vld [vmem:[%s6] sm:$0x1]
  %v604 = vlaneseq
  %v605 = vshrl.u32 %v604, 7
  %v606 = vsub.s32 0, %v605
  %v607 = vrot.slane %v602, %v606
  %v625 = vunpack.c.l.b16 %v586
  %v626 = vunpack.c.l.b16 %v587
  %v627 = vunpack.c.l.b16 %v588
  %v628 = vunpack.c.l.b16 %v589
  %v629 = vunpack.c.l.b16 %v590
  %v630 = vunpack.c.l.b16 %v591
  %v631 = vunpack.c.l.b16 %v592
  %v632 = vunpack.c.l.b16 %v593
  %v633 = vunpack.c.l.b16 %v594
  %v634 = vunpack.c.l.b16 %v595
  %v635 = vunpack.c.l.b16 %v596
  %v636 = vunpack.c.l.b16 %v597
  %v637 = vunpack.c.l.b16 %v598
  %v638 = vunpack.c.l.b16 %v599
  %v639 = vunpack.c.l.b16 %v600
  %v640 = vunpack.c.l.b16 %v601
  %v641 = vpack.c.b16 %v626, %v625
  %v642 = vpack.c.b16 %v628, %v627
  %v643 = vpack.c.b16 %v630, %v629
  %v644 = vpack.c.b16 %v632, %v631
  %v645 = vpack.c.b16 %v634, %v633
  %v646 = vpack.c.b16 %v636, %v635
  %v647 = vpack.c.b16 %v638, %v637
  %v648 = vpack.c.b16 %v640, %v639
  %657 = vmatprep.subr.bf16.mxu0 0
  %658 = vmatpush1.bf16.msra.mxu0 %v641
  %659 = vmatprep.subr.bf16.mxu0 0
  %660 = vmatpush1.bf16.msra.mxu0 %v642
  %661 = vmatprep.subr.bf16.mxu0 0
  %662 = vmatpush1.bf16.msra.mxu0 %v643
  %663 = vmatprep.subr.bf16.mxu0 0
  %664 = vmatpush1.bf16.msra.mxu0 %v644
  %665 = vmatprep.subr.bf16.mxu0 0
  %666 = vmatpush1.bf16.msra.mxu0 %v645
  %667 = vmatprep.subr.bf16.mxu0 0
  %668 = vmatpush1.bf16.msra.mxu0 %v646
  %669 = vmatprep.subr.bf16.mxu0 0
  %670 = vmatpush1.bf16.msra.mxu0 %v647
  %671 = vmatprep.subr.bf16.mxu0 0
  %672 = vmatpush1.bf16.msra.mxu0 %v648
  %673 = vmatprep.subr.bf16.mxu0 0
  %674 = vmatpush1.bf16.msra.mxu0 0
  %675 = vmatprep.subr.bf16.mxu0 0
  %676 = vmatpush1.bf16.msra.mxu0 0
  %677 = vmatprep.subr.bf16.mxu0 0
  %678 = vmatpush1.bf16.msra.mxu0 0
  %679 = vmatprep.subr.bf16.mxu0 0
  %680 = vmatpush1.bf16.msra.mxu0 0
  %681 = vmatprep.subr.bf16.mxu0 0
  %682 = vmatpush1.bf16.msra.mxu0 0
  %683 = vmatprep.subr.bf16.mxu0 0
  %684 = vmatpush1.bf16.msra.mxu0 0
  %685 = vmatprep.subr.bf16.mxu0 0
  %686 = vmatpush1.bf16.msra.mxu0 0
  %687 = vmatprep.subr.bf16.mxu0 0
  %688 = vmatpush1.bf16.msra.mxu0 0
  %689 = vmatprep.mubr.bf16.mxu0 0
  %690 = vmatmul.mubr.bf16.gmra.mrb[0].mxu0 %v585
  %v691 = vpop.f32.mrb[0].mxu0
  %v692 = vadd.f32 %v607, %v691
  %v693 = vpop.f32.mrb[0].mxu0
  %v694 = vpop.f32.mrb[0].mxu0
  %v695 = vpop.f32.mrb[0].mxu0
  %696 = vdwg.mxu0
  %697 = vmax.xlane.f32.xlu0 %v692
  %v698 = vpop.xlane.xlu0 %697
  %v699 = vsub.f32 %v692, %v698
  %v700 = vmul.f32 %v699, 1.442695
  %v701 = vpow.pop %v700
  %702 = vadd.xlane.f32.xlu0 %v701
  %v703 = vpop.xlane.xlu0 %702
  %v704 = vlog2.pop %v703
  %v705 = vmul.f32 %v704, 0.6931472
  %v706 = vsub.f32 %v699, %v705
  %707 = vst [vmem:[%s7] sm:$0xff] %v706
  // Predicated region
  $region30: #{mlp2_forward.1} parent=0 // pred_check
    _
  $region31: #{mlp2_forward.1} parent=0 // pred_check_branch
    %709 = sbr.rel (0) target = $region33
  $region32: #{mlp2_forward.1} parent=0 // pred_region
    _
  $region33: #{mlp2_forward.1} parent=0 // pred_fallthru
    _
  // Predicated region
  $region34: #{mlp2_forward.1} parent=0 // pred_check
    _
  $region35: #{mlp2_forward.1} parent=0 // pred_check_branch
    %711 = sbr.rel (0) target = $region37
  $region36: #{mlp2_forward.1} parent=0 // pred_region
    _
  $region37: #{mlp2_forward.1} parent=0 // pred_fallthru
    _

</llo_original>
